<compile_context>
chip_gen: v5e
topology: v5e:2x2
jax: 0.10.0
libtpu: 0.0.40
codegen_flags: <defaults>
</compile_context>

<pallas_src>
import jax
import jax.numpy as jnp
from jax.experimental import pallas as pl
from jax.experimental.pallas import tpu as pltpu


H_PAD = 128           # lane-padded hidden dimension (real hidden = 32)
C_PAD = 128           # lane-padded class dimension (real classes = 2)
_NEG_BIG = -1e30      # pad-lane bias (kept in f32): exp(_NEG_BIG - max) == 0 exactly


def _mlp_kernel(x_ref, w1_ref, b1_ref, w2_ref, b2_ref,
                w3_ref, b3_ref, w4_ref, b4_ref, out_ref):
    # x is streamed as bf16; weights are bf16 and VMEM-resident (constant
    # index_maps).  Every matmul is a native bf16 MXU pass with f32 accumulation.
    x = x_ref[...]                                               # (TM, F) bf16

    # input_layer + ReLU
    h = jnp.dot(x, w1_ref[...],
                preferred_element_type=jnp.float32) + b1_ref[...]
    h = jnp.maximum(h, 0.0)

    # first_hidden + ReLU   (dropout = identity at inference)
    h = jnp.dot(h.astype(jnp.bfloat16), w2_ref[...],
                preferred_element_type=jnp.float32) + b2_ref[...]
    h = jnp.maximum(h, 0.0)

    # second_hidden + ReLU  (dropout = identity at inference)
    h = jnp.dot(h.astype(jnp.bfloat16), w3_ref[...],
                preferred_element_type=jnp.float32) + b3_ref[...]
    h = jnp.maximum(h, 0.0)

    # third_hidden (logits) — class lanes padded to 128; pad lanes carry zero
    # weights and a -1e30 f32 bias, so they vanish in the softmax below.
    logits = jnp.dot(h.astype(jnp.bfloat16), w4_ref[...],
                     preferred_element_type=jnp.float32) + b4_ref[...]

    # Numerically stable softmax over the (padded) class axis.
    m = jnp.max(logits, axis=1, keepdims=True)
    e = jnp.exp(logits - m)
    s = jnp.sum(e, axis=1, keepdims=True)
    out_ref[...] = e * pl.reciprocal(s, approx=False)            # exact: 1e-5 tol


def _round_up(x, m):
    return (x + m - 1) // m * m


def _vmem_budget_bytes():
    """~75% of physical per-core VMEM; falls back to v7x's 64 MiB (smallest)."""
    try:
        cap = int(pltpu.get_tpu_info().vmem_capacity_bytes)
    except Exception:
        cap = 64 << 20
    return (cap * 3) // 4


def _pick_tile(B, F, resident_bytes, vmem_budget):
    """Pick TM (rows per grid step): as large as VMEM allows, but keep >= 2
    grid steps when the batch allows so v7x megacore gets both TCs."""
    B8 = _round_up(max(B, 1), 8)
    tm = min(1024, B8)
    if B8 >= 16 and B8 <= tm:                 # would be a single step: split in 2
        tm = _round_up(pl.cdiv(B8, 2), 8)

    def step_bytes(t):
        return (2 * t * F * 2                 # x tile, bf16, double-buffered
                + 2 * t * C_PAD * 4           # out tile, f32, double-buffered
                + 6 * t * H_PAD * 4)          # activation-temporary margin

    while tm > 8 and resident_bytes + step_bytes(tm) + (2 << 20) > vmem_budget:
        tm = _round_up(tm // 2, 8)
    return tm, step_bytes(tm)


def toxic_classifier_forward(inputs, params):
    """inputs: (B, 1, max_seq_len*emb_dim) — same convention as the PyTorch forward."""
    x = jnp.squeeze(inputs, axis=1)                       # glue: squeeze(1)
    B, F = x.shape
    x = x.astype(jnp.bfloat16)                            # stream activations as bf16
    (w1, b1), (w2, b2), (w3, b3), (w4, b4) = params
    H = w1.shape[1]
    C = w4.shape[1]
    assert H <= H_PAD and C <= C_PAD

    # --- parameter prep (glue, outside the kernel) -------------------------
    def pad_w(w, rows, cols):                             # bf16, zero-padded
        out = jnp.zeros((rows, cols), jnp.bfloat16)
        return out.at[:w.shape[0], :w.shape[1]].set(w.astype(jnp.bfloat16))

    def pad_b(b, cols, fill=0.0):                         # f32, fill-padded
        out = jnp.full((1, cols), fill, jnp.float32)
        return out.at[:, :b.shape[1]].set(b.astype(jnp.float32))

    w1p, b1p = pad_w(w1, F, H_PAD),     pad_b(b1, H_PAD)
    w2p, b2p = pad_w(w2, H_PAD, H_PAD), pad_b(b2, H_PAD)
    w3p, b3p = pad_w(w3, H_PAD, H_PAD), pad_b(b3, H_PAD)
    w4p, b4p = pad_w(w4, H_PAD, C_PAD), pad_b(b4, C_PAD, fill=_NEG_BIG)  # b4p stays f32

    # --- tiling & VMEM budget ----------------------------------------------
    resident = 2 * sum(int(a.size) * a.dtype.itemsize
                       for a in (w1p, b1p, w2p, b2p, w3p, b3p, w4p, b4p))
    vmem_budget = _vmem_budget_bytes()
    TM, step_bytes = _pick_tile(B, F, resident, vmem_budget)

    B_pad = _round_up(B, TM)
    if B_pad != B:
        x = jnp.pad(x, ((0, B_pad - B), (0, 0)))
    grid = (B_pad // TM,)

    vmem_limit = int(min(vmem_budget,
                         max(resident + step_bytes + (4 << 20), 16 << 20)))

    const2d = lambda shape: pl.BlockSpec(shape, lambda i: (0, 0))   # VMEM-resident

    out = pl.pallas_call(
        _mlp_kernel,
        out_shape=jax.ShapeDtypeStruct((B_pad, C_PAD), jnp.float32),
        grid=grid,
        in_specs=[
            pl.BlockSpec((TM, F), lambda i: (i, 0)),      # x: streamed per block (bf16)
            const2d((F, H_PAD)),     const2d((1, H_PAD)),     # input_layer
            const2d((H_PAD, H_PAD)), const2d((1, H_PAD)),     # first_hidden
            const2d((H_PAD, H_PAD)), const2d((1, H_PAD)),     # second_hidden
            const2d((H_PAD, C_PAD)), const2d((1, C_PAD)),     # third_hidden (padded)
        ],
        out_specs=pl.BlockSpec((TM, C_PAD), lambda i: (i, 0)),
        compiler_params=pltpu.CompilerParams(
            dimension_semantics=("parallel",),            # megacore sharding (v7x)
            vmem_limit_bytes=vmem_limit,
        ),
    )(x, w1p, b1p, w2p, b2p, w3p, b3p, w4p, b4p)

    return out[:B, :C]


def init_params(key, in_features, hidden, n_classes=2):
    """Deterministic synthetic init (PyTorch-Linear-style uniform bounds).
    Weights stored transposed: (in, out)."""
    def linear(key, fan_in, fan_out):
        kw, kb = jax.random.split(key)
        bound = 1.0 / jnp.sqrt(jnp.float32(fan_in))
        w = jax.random.uniform(kw, (fan_in, fan_out), jnp.float32, -bound, bound)
        b = jax.random.uniform(kb, (1, fan_out), jnp.float32, -bound, bound)
        return w, b

    k1, k2, k3, k4 = jax.random.split(key, 4)
    return (
        linear(k1, in_features, hidden),   # input_layer
        linear(k2, hidden, hidden),        # first_hidden
        linear(k3, hidden, hidden),        # second_hidden
        linear(k4, hidden, n_classes),     # third_hidden
    )


def _ref_forward(inputs, params):
    """Pure-JAX reference of the same math: bf16 matmul inputs, f32 accumulation."""
    x = jnp.squeeze(inputs, axis=1)
    (w1, b1), (w2, b2), (w3, b3), (w4, b4) = params

    def layer(h, w, b):
        return jnp.dot(h.astype(jnp.bfloat16), w.astype(jnp.bfloat16),
                       preferred_element_type=jnp.float32) + b.astype(jnp.float32)

    h = jax.nn.relu(layer(x, w1, b1))
    h = jax.nn.relu(layer(h, w2, b2))
    h = jax.nn.relu(layer(h, w3, b3))
    logits = layer(h, w4, b4)
    return jax.nn.softmax(logits, axis=1)


if __name__ == "__main__":
    # Small shapes consistent with the module: batch=2, max_seq_len=8, emb_dim=32, hidden=32.
    batch, max_seq_len, emb_dim, hidden = 2, 8, 32, 32
    in_features = max_seq_len * emb_dim   # 256

    key = jax.random.PRNGKey(0)
    k_in, k_param, k_big = jax.random.split(key, 3)

    # PyTorch forward receives (B, 1, max_seq_len*emb_dim) and squeezes dim 1.
    inputs = jax.random.normal(k_in, (batch, 1, in_features), dtype=jnp.float32)
    params = init_params(k_param, in_features, hidden, n_classes=2)

    out = jax.block_until_ready(toxic_classifier_forward(inputs, params))
    expected = _ref_forward(inputs, params)
    assert out.shape == (batch, 2)
    assert jnp.allclose(out, expected, atol=2e-5, rtol=2e-5)
    assert jnp.allclose(jnp.sum(out, axis=1), 1.0, atol=1e-5)

    # Larger batch: exercises the multi-step, megacore-parallel, pipelined grid path.
    big_batch = 512
    big_inputs = jax.random.normal(k_big, (big_batch, 1, in_features), dtype=jnp.float32)
    out_big = jax.block_until_ready(toxic_classifier_forward(big_inputs, params))
    expected_big = _ref_forward(big_inputs, params)
    assert out_big.shape == (big_batch, 2)
    assert jnp.allclose(out_big, expected_big, atol=2e-5, rtol=2e-5)
    assert jnp.allclose(jnp.sum(out_big, axis=1), 1.0, atol=1e-5)

    print("KERNEL_OK")
</pallas_src>

<mosaic_0001>
module attributes {stable_mosaic.version = 11 : i64} {
  func.func @_mlp_kernel(%arg0: i32, %arg1: memref<8x256xbf16, #tpu.memory_space<vmem>>, %arg2: memref<256x128xbf16, #tpu.memory_space<vmem>>, %arg3: memref<1x128xf32, #tpu.memory_space<vmem>>, %arg4: memref<128x128xbf16, #tpu.memory_space<vmem>>, %arg5: memref<1x128xf32, #tpu.memory_space<vmem>>, %arg6: memref<128x128xbf16, #tpu.memory_space<vmem>>, %arg7: memref<1x128xf32, #tpu.memory_space<vmem>>, %arg8: memref<128x128xbf16, #tpu.memory_space<vmem>>, %arg9: memref<1x128xf32, #tpu.memory_space<vmem>>, %arg10: memref<8x128xf32, #tpu.memory_space<vmem>>) attributes {dimension_semantics = [#tpu.dimension_semantics<parallel>], iteration_bounds = array<i64: 1>, scalar_prefetch = 0 : i64, scratch_operands = 0 : i64, tpu.core_type = #tpu.core_type<tc>, window_params = [{transform_indices = @transform_0, window_bounds = array<i64: 8, 256>}, {pipeline_mode = #tpu.pipeline_mode<synchronous>, transform_indices = @transform_1, window_bounds = array<i64: 256, 128>}, {pipeline_mode = #tpu.pipeline_mode<synchronous>, transform_indices = @transform_2, window_bounds = array<i64: 1, 128>}, {pipeline_mode = #tpu.pipeline_mode<synchronous>, transform_indices = @transform_3, window_bounds = array<i64: 128, 128>}, {pipeline_mode = #tpu.pipeline_mode<synchronous>, transform_indices = @transform_4, window_bounds = array<i64: 1, 128>}, {pipeline_mode = #tpu.pipeline_mode<synchronous>, transform_indices = @transform_5, window_bounds = array<i64: 128, 128>}, {pipeline_mode = #tpu.pipeline_mode<synchronous>, transform_indices = @transform_6, window_bounds = array<i64: 1, 128>}, {pipeline_mode = #tpu.pipeline_mode<synchronous>, transform_indices = @transform_7, window_bounds = array<i64: 128, 128>}, {pipeline_mode = #tpu.pipeline_mode<synchronous>, transform_indices = @transform_8, window_bounds = array<i64: 1, 128>}, {transform_indices = @transform_9, window_bounds = array<i64: 8, 128>}]} {
    %c0 = arith.constant 0 : index
    %c0_0 = arith.constant 0 : index
    %0 = vector.load %arg1[%c0, %c0_0] : memref<8x256xbf16, #tpu.memory_space<vmem>>, vector<8x256xbf16>
    %c0_1 = arith.constant 0 : index
    %c0_2 = arith.constant 0 : index
    %1 = vector.load %arg2[%c0_1, %c0_2] : memref<256x128xbf16, #tpu.memory_space<vmem>>, vector<256x128xbf16>
    %cst = arith.constant dense<0.000000e+00> : vector<8x128xf32>
    %2 = tpu.matmul %0, %1, %cst {dimension_numbers = #tpu.dot_dimension_numbers<[1], [0], [0], [1], [0, 0, 1, 1], [], []>} : vector<8x256xbf16>, vector<256x128xbf16>, vector<8x128xf32> -> vector<8x128xf32>
    %c0_3 = arith.constant 0 : index
    %c0_4 = arith.constant 0 : index
    %3 = vector.load %arg3[%c0_3, %c0_4] : memref<1x128xf32, #tpu.memory_space<vmem>>, vector<1x128xf32>
    %4 = vector.broadcast %3 : vector<1x128xf32> to vector<8x128xf32>
    %5 = arith.addf %2, %4 : vector<8x128xf32>
    %cst_5 = arith.constant 0.000000e+00 : f32
    %6 = vector.broadcast %cst_5 : f32 to vector<8x128xf32>
    %7 = arith.maximumf %5, %6 : vector<8x128xf32>
    %8 = arith.truncf %7 : vector<8x128xf32> to vector<8x128xbf16>
    %c0_6 = arith.constant 0 : index
    %c0_7 = arith.constant 0 : index
    %9 = vector.load %arg4[%c0_6, %c0_7] : memref<128x128xbf16, #tpu.memory_space<vmem>>, vector<128x128xbf16>
    %cst_8 = arith.constant dense<0.000000e+00> : vector<8x128xf32>
    %10 = tpu.matmul %8, %9, %cst_8 {dimension_numbers = #tpu.dot_dimension_numbers<[1], [0], [0], [1], [0, 0, 1, 1], [], []>} : vector<8x128xbf16>, vector<128x128xbf16>, vector<8x128xf32> -> vector<8x128xf32>
    %c0_9 = arith.constant 0 : index
    %c0_10 = arith.constant 0 : index
    %11 = vector.load %arg5[%c0_9, %c0_10] : memref<1x128xf32, #tpu.memory_space<vmem>>, vector<1x128xf32>
    %12 = vector.broadcast %11 : vector<1x128xf32> to vector<8x128xf32>
    %13 = arith.addf %10, %12 : vector<8x128xf32>
    %cst_11 = arith.constant 0.000000e+00 : f32
    %14 = vector.broadcast %cst_11 : f32 to vector<8x128xf32>
    %15 = arith.maximumf %13, %14 : vector<8x128xf32>
    %16 = arith.truncf %15 : vector<8x128xf32> to vector<8x128xbf16>
    %c0_12 = arith.constant 0 : index
    %c0_13 = arith.constant 0 : index
    %17 = vector.load %arg6[%c0_12, %c0_13] : memref<128x128xbf16, #tpu.memory_space<vmem>>, vector<128x128xbf16>
    %cst_14 = arith.constant dense<0.000000e+00> : vector<8x128xf32>
    %18 = tpu.matmul %16, %17, %cst_14 {dimension_numbers = #tpu.dot_dimension_numbers<[1], [0], [0], [1], [0, 0, 1, 1], [], []>} : vector<8x128xbf16>, vector<128x128xbf16>, vector<8x128xf32> -> vector<8x128xf32>
    %c0_15 = arith.constant 0 : index
    %c0_16 = arith.constant 0 : index
    %19 = vector.load %arg7[%c0_15, %c0_16] : memref<1x128xf32, #tpu.memory_space<vmem>>, vector<1x128xf32>
    %20 = vector.broadcast %19 : vector<1x128xf32> to vector<8x128xf32>
    %21 = arith.addf %18, %20 : vector<8x128xf32>
    %cst_17 = arith.constant 0.000000e+00 : f32
    %22 = vector.broadcast %cst_17 : f32 to vector<8x128xf32>
    %23 = arith.maximumf %21, %22 : vector<8x128xf32>
    %24 = arith.truncf %23 : vector<8x128xf32> to vector<8x128xbf16>
    %c0_18 = arith.constant 0 : index
    %c0_19 = arith.constant 0 : index
    %25 = vector.load %arg8[%c0_18, %c0_19] : memref<128x128xbf16, #tpu.memory_space<vmem>>, vector<128x128xbf16>
    %cst_20 = arith.constant dense<0.000000e+00> : vector<8x128xf32>
    %26 = tpu.matmul %24, %25, %cst_20 {dimension_numbers = #tpu.dot_dimension_numbers<[1], [0], [0], [1], [0, 0, 1, 1], [], []>} : vector<8x128xbf16>, vector<128x128xbf16>, vector<8x128xf32> -> vector<8x128xf32>
    %c0_21 = arith.constant 0 : index
    %c0_22 = arith.constant 0 : index
    %27 = vector.load %arg9[%c0_21, %c0_22] : memref<1x128xf32, #tpu.memory_space<vmem>>, vector<1x128xf32>
    %28 = vector.broadcast %27 : vector<1x128xf32> to vector<8x128xf32>
    %29 = arith.addf %26, %28 : vector<8x128xf32>
    %cst_23 = arith.constant dense<0xFF800000> : vector<8xf32>
    %30 = vector.multi_reduction <maximumf>, %29, %cst_23 [1] : vector<8x128xf32> to vector<8xf32>
    %31 = vector.shape_cast %30 : vector<8xf32> to vector<8x1xf32>
    %32 = vector.broadcast %31 : vector<8x1xf32> to vector<8x128xf32>
    %33 = arith.subf %29, %32 : vector<8x128xf32>
    %34 = math.exp %33 : vector<8x128xf32>
    %cst_24 = arith.constant dense<0.000000e+00> : vector<8xf32>
    %35 = vector.multi_reduction <add>, %34, %cst_24 [1] : vector<8x128xf32> to vector<8xf32>
    %36 = vector.shape_cast %35 : vector<8xf32> to vector<8x1xf32>
    %37 = tpu.reciprocal %36 : vector<8x1xf32> -> vector<8x1xf32>
    %38 = vector.broadcast %37 : vector<8x1xf32> to vector<8x128xf32>
    %39 = arith.mulf %34, %38 : vector<8x128xf32>
    %c0_25 = arith.constant 0 : index
    %c0_26 = arith.constant 0 : index
    %40 = vector.load %arg10[%c0_25, %c0_26] : memref<8x128xf32, #tpu.memory_space<vmem>>, vector<8x128xf32>
    tpu.vector_store %arg10[%c0_25, %c0_26], %39 {strides = array<i32>} : memref<8x128xf32, #tpu.memory_space<vmem>>, vector<8x128xf32>,
    return
  }
  func.func @transform_0(%arg0: i32) -> (i32, i32) {
    %c0_i32 = arith.constant 0 : i32
    %c0_i32_0 = arith.constant 0 : i32
    return %arg0, %c0_i32 : i32, i32
  }
  func.func @transform_1(%arg0: i32) -> (i32, i32) {
    %c0_i32 = arith.constant 0 : i32
    %c0_i32_0 = arith.constant 0 : i32
    %c0_i32_1 = arith.constant 0 : i32
    return %c0_i32, %c0_i32_0 : i32, i32
  }
  func.func @transform_2(%arg0: i32) -> (i32, i32) {
    %c0_i32 = arith.constant 0 : i32
    %c0_i32_0 = arith.constant 0 : i32
    %c0_i32_1 = arith.constant 0 : i32
    return %c0_i32, %c0_i32_0 : i32, i32
  }
  func.func @transform_3(%arg0: i32) -> (i32, i32) {
    %c0_i32 = arith.constant 0 : i32
    %c0_i32_0 = arith.constant 0 : i32
    %c0_i32_1 = arith.constant 0 : i32
    return %c0_i32, %c0_i32_0 : i32, i32
  }
  func.func @transform_4(%arg0: i32) -> (i32, i32) {
    %c0_i32 = arith.constant 0 : i32
    %c0_i32_0 = arith.constant 0 : i32
    %c0_i32_1 = arith.constant 0 : i32
    return %c0_i32, %c0_i32_0 : i32, i32
  }
  func.func @transform_5(%arg0: i32) -> (i32, i32) {
    %c0_i32 = arith.constant 0 : i32
    %c0_i32_0 = arith.constant 0 : i32
    %c0_i32_1 = arith.constant 0 : i32
    return %c0_i32, %c0_i32_0 : i32, i32
  }
  func.func @transform_6(%arg0: i32) -> (i32, i32) {
    %c0_i32 = arith.constant 0 : i32
    %c0_i32_0 = arith.constant 0 : i32
    %c0_i32_1 = arith.constant 0 : i32
    return %c0_i32, %c0_i32_0 : i32, i32
  }
  func.func @transform_7(%arg0: i32) -> (i32, i32) {
    %c0_i32 = arith.constant 0 : i32
    %c0_i32_0 = arith.constant 0 : i32
    %c0_i32_1 = arith.constant 0 : i32
    return %c0_i32, %c0_i32_0 : i32, i32
  }
  func.func @transform_8(%arg0: i32) -> (i32, i32) {
    %c0_i32 = arith.constant 0 : i32
    %c0_i32_0 = arith.constant 0 : i32
    %c0_i32_1 = arith.constant 0 : i32
    return %c0_i32, %c0_i32_0 : i32, i32
  }
  func.func @transform_9(%arg0: i32) -> (i32, i32) {
    %c0_i32 = arith.constant 0 : i32
    %c0_i32_0 = arith.constant 0 : i32
    return %arg0, %c0_i32 : i32, i32
  }
}

</mosaic_0001>

<llo_original>
// kernel: tpu_custom_call.1
$region0: #{tpu_custom_call.1}
  #allocation0 [shape = 'u32[]', space=smem, size = 0x4, offset = 0x4, fixed_abs, tag = 'smem constant byte address 0x4 - core index']
  #allocation1 [shape = 'u32[72,128]{1,0:T(1,128)}', space=vmem, size = 0x9000, scoped, tag = 'internal scratch']
  %s0 = inlined_call_operand.hbm [shape: bf16[8,256], index: 0, kind: input, shape index: {}]
  %s1 = inlined_call_operand.hbm [shape: bf16[256,128], index: 1, kind: input, shape index: {}]
  %s2 = inlined_call_operand.vmem [shape: f32[1,128], index: 2, kind: input, shape index: {}]
  %s3 = inlined_call_operand.hbm [shape: bf16[128,128], index: 3, kind: input, shape index: {}]
  %s4 = inlined_call_operand.vmem [shape: f32[1,128], index: 4, kind: input, shape index: {}]
  %s5 = inlined_call_operand.hbm [shape: bf16[128,128], index: 5, kind: input, shape index: {}]
  %s6 = inlined_call_operand.vmem [shape: f32[1,128], index: 6, kind: input, shape index: {}]
  %s7 = inlined_call_operand.hbm [shape: bf16[128,128], index: 7, kind: input, shape index: {}]
  %s8 = inlined_call_operand.vmem [shape: f32[1,128], index: 8, kind: input, shape index: {}]
  %s9 = inlined_call_operand.hbm [shape: f32[8,128], index: 9, kind: output, shape index: {}]
  %s10 = sld [smem:[#allocation0]]
  $region66: #{tpu_custom_call.1} parent=0
    _
  %s12 = ssub.s32 1, %s10
  %s13 = scalar_select 0, %s12, %s10
  $region1: #{tpu_custom_call.1} parent=0
    #allocation2 [shape = 'u8[4096]{0}', space=vmem, size = 0x1000, scoped, tag = 'input window, operand 0, single buffered']
    #allocation3 [shape = 's32[1]{0}', space=sflag, size = 0x4, scoped, tag = 'scoped memory for tpu_custom_call.1']
    #allocation4 [shape = 's32[1]{0}', space=sflag, size = 0x4, scoped, tag = 'scoped memory for tpu_custom_call.1']
    #allocation5 [shape = 'u8[65536]{0}', space=vmem, size = 0x10000, scoped, tag = 'input window, operand 1, single buffered']
    #allocation6 [shape = 's32[1]{0}', space=sflag, size = 0x4, scoped, tag = 'scoped memory for tpu_custom_call.1']
    #allocation7 [shape = 'u8[32768]{0}', space=vmem, size = 0x8000, scoped, tag = 'input window, operand 3, single buffered']
    #allocation8 [shape = 'u8[32768]{0}', space=vmem, size = 0x8000, scoped, tag = 'input window, operand 5, single buffered']
    #allocation9 [shape = 's32[1]{0}', space=sflag, size = 0x4, scoped, tag = 'scoped memory for tpu_custom_call.1']
    #allocation10 [shape = 'u8[32768]{0}', space=vmem, size = 0x8000, scoped, tag = 'input window, operand 7, single buffered']
    #allocation11 [shape = 'u8[4096]{0}', space=vmem, size = 0x1000, scoped, tag = 'output window, operand 0, single buffered']
    %14 = vsyncpa [#allocation3], 0
    %15 = vsyncpa [#allocation6], 0
    %16 = vsyncpa [#allocation9], 0
    %17 = vsyncpa [#allocation4], 0
    // Predicated region
    $region2: #{tpu_custom_call.1} parent=1 // pred_check
      _
    $region3: #{tpu_custom_call.1} parent=1 // pred_check_branch
      %19 = sbr.rel (0) target = $region5
    $region4: #{tpu_custom_call.1} parent=1 // pred_region
      %21 = vsyncadd [#allocation3], 0
      %s23 = sshll.u32 %s0, 4
      %s24 = int_to_ptr.hbm [resolvable:$true] %s23
      %s25 = sshll.u32 [#allocation2], 4
      %s26 = int_to_ptr.vmem [resolvable:$true] %s25
      %28 = dma.hbm_to_vmem [thread:$0]  %s24, 128, %s26, [#allocation3]
    $region5: #{tpu_custom_call.1} parent=1 // pred_fallthru
      _
    // Predicated region
    $region6: #{tpu_custom_call.1} parent=1 // pred_check
      _
    $region7: #{tpu_custom_call.1} parent=1 // pred_check_branch
      %30 = sbr.rel (0) target = $region9
    $region8: #{tpu_custom_call.1} parent=1 // pred_region
      %32 = vsyncadd [#allocation6], 0
      %s33 = sshll.u32 %s1, 4
      %s34 = int_to_ptr.hbm [resolvable:$true] %s33
      %s35 = sshll.u32 [#allocation5], 4
      %s36 = int_to_ptr.vmem [resolvable:$true] %s35
      %41 = dma.hbm_to_vmem [thread:$0]  %s34, 2048, %s36, [#allocation6], 64, 64, 4
    $region9: #{tpu_custom_call.1} parent=1 // pred_fallthru
      _
    // Predicated region
    $region10: #{tpu_custom_call.1} parent=1 // pred_check
      _
    $region11: #{tpu_custom_call.1} parent=1 // pred_check_branch
      %43 = sbr.rel (0) target = $region13
    $region12: #{tpu_custom_call.1} parent=1 // pred_region
      _
    $region13: #{tpu_custom_call.1} parent=1 // pred_fallthru
      _
    // Predicated region
    $region14: #{tpu_custom_call.1} parent=1 // pred_check
      _
    $region15: #{tpu_custom_call.1} parent=1 // pred_check_branch
      %45 = sbr.rel (0) target = $region17
    $region16: #{tpu_custom_call.1} parent=1 // pred_region
      %47 = vsyncadd [#allocation6], 0
      %s48 = sshll.u32 %s3, 4
      %s49 = int_to_ptr.hbm [resolvable:$true] %s48
      %s50 = sshll.u32 [#allocation7], 4
      %s51 = int_to_ptr.vmem [resolvable:$true] %s50
      %56 = dma.hbm_to_vmem [thread:$0]  %s49, 1024, %s51, [#allocation6], 64, 64, 4
    $region17: #{tpu_custom_call.1} parent=1 // pred_fallthru
      _
    // Predicated region
    $region18: #{tpu_custom_call.1} parent=1 // pred_check
      _
    $region19: #{tpu_custom_call.1} parent=1 // pred_check_branch
      %58 = sbr.rel (0) target = $region21
    $region20: #{tpu_custom_call.1} parent=1 // pred_region
      _
    $region21: #{tpu_custom_call.1} parent=1 // pred_fallthru
      _
    // Predicated region
    $region22: #{tpu_custom_call.1} parent=1 // pred_check
      _
    $region23: #{tpu_custom_call.1} parent=1 // pred_check_branch
      %60 = sbr.rel (0) target = $region25
    $region24: #{tpu_custom_call.1} parent=1 // pred_region
      %62 = vsyncadd [#allocation9], 0
      %s63 = sshll.u32 %s5, 4
      %s64 = int_to_ptr.hbm [resolvable:$true] %s63
      %s65 = sshll.u32 [#allocation8], 4
      %s66 = int_to_ptr.vmem [resolvable:$true] %s65
      %71 = dma.hbm_to_vmem [thread:$0]  %s64, 1024, %s66, [#allocation9], 64, 64, 4
    $region25: #{tpu_custom_call.1} parent=1 // pred_fallthru
      _
    // Predicated region
    $region26: #{tpu_custom_call.1} parent=1 // pred_check
      _
    $region27: #{tpu_custom_call.1} parent=1 // pred_check_branch
      %73 = sbr.rel (0) target = $region29
    $region28: #{tpu_custom_call.1} parent=1 // pred_region
      _
    $region29: #{tpu_custom_call.1} parent=1 // pred_fallthru
      _
    // Predicated region
    $region30: #{tpu_custom_call.1} parent=1 // pred_check
      _
    $region31: #{tpu_custom_call.1} parent=1 // pred_check_branch
      %75 = sbr.rel (0) target = $region33
    $region32: #{tpu_custom_call.1} parent=1 // pred_region
      %77 = vsyncadd [#allocation9], 0
      %s78 = sshll.u32 %s7, 4
      %s79 = int_to_ptr.hbm [resolvable:$true] %s78
      %s80 = sshll.u32 [#allocation10], 4
      %s81 = int_to_ptr.vmem [resolvable:$true] %s80
      %86 = dma.hbm_to_vmem [thread:$0]  %s79, 1024, %s81, [#allocation9], 64, 64, 4
    $region33: #{tpu_custom_call.1} parent=1 // pred_fallthru
      _
    // Predicated region
    $region34: #{tpu_custom_call.1} parent=1 // pred_check
      _
    $region35: #{tpu_custom_call.1} parent=1 // pred_check_branch
      %88 = sbr.rel (0) target = $region37
    $region36: #{tpu_custom_call.1} parent=1 // pred_region
      _
    $region37: #{tpu_custom_call.1} parent=1 // pred_fallthru
      _
    // Predicated region
    $region38: #{tpu_custom_call.1} parent=1 // pred_check
      _
    $region39: #{tpu_custom_call.1} parent=1 // pred_check_branch
      %90 = sbr.rel (0) target = $region41
    $region40: #{tpu_custom_call.1} parent=1 // pred_region
      %92 = dma.done [#allocation3], 128
    $region41: #{tpu_custom_call.1} parent=1 // pred_fallthru
      _
    // Predicated region
    $region42: #{tpu_custom_call.1} parent=1 // pred_check
      _
    $region43: #{tpu_custom_call.1} parent=1 // pred_check_branch
      %94 = sbr.rel (0) target = $region45
    $region44: #{tpu_custom_call.1} parent=1 // pred_region
      %96 = dma.done [#allocation6], 2048
    $region45: #{tpu_custom_call.1} parent=1 // pred_fallthru
      _
    // Predicated region
    $region46: #{tpu_custom_call.1} parent=1 // pred_check
      _
    $region47: #{tpu_custom_call.1} parent=1 // pred_check_branch
      %98 = sbr.rel (0) target = $region49
    $region48: #{tpu_custom_call.1} parent=1 // pred_region
      %100 = dma.done [#allocation6], 1024
    $region49: #{tpu_custom_call.1} parent=1 // pred_fallthru
      _
    // Predicated region
    $region50: #{tpu_custom_call.1} parent=1 // pred_check
      _
    $region51: #{tpu_custom_call.1} parent=1 // pred_check_branch
      %102 = sbr.rel (0) target = $region53
    $region52: #{tpu_custom_call.1} parent=1 // pred_region
      %104 = dma.done [#allocation9], 1024
    $region53: #{tpu_custom_call.1} parent=1 // pred_fallthru
      _
    // Predicated region
    $region54: #{tpu_custom_call.1} parent=1 // pred_check
      _
    $region55: #{tpu_custom_call.1} parent=1 // pred_check_branch
      %106 = sbr.rel (0) target = $region57
    $region56: #{tpu_custom_call.1} parent=1 // pred_region
      %108 = dma.done [#allocation9], 1024
    $region57: #{tpu_custom_call.1} parent=1 // pred_fallthru
      _
    %v109 = vld [vmem:[#allocation2] sm:$0xff]
    %v110 = vld [vmem:[#allocation5] sm:$0xf]
    %v111 = vld [vmem:[#allocation5 + $0x4] sm:$0xf]
    %v112 = vld [vmem:[#allocation5 + $0x8] sm:$0xf]
    %v113 = vld [vmem:[#allocation5 + $0xc] sm:$0xf]
    %v114 = vld [vmem:[#allocation5 + $0x10] sm:$0xf]
    %v115 = vld [vmem:[#allocation5 + $0x14] sm:$0xf]
    %v116 = vld [vmem:[#allocation5 + $0x18] sm:$0xf]
    %v117 = vld [vmem:[#allocation5 + $0x1c] sm:$0xf]
    %v118 = vld [vmem:[#allocation5 + $0x20] sm:$0xf]
    %v119 = vld [vmem:[#allocation5 + $0x24] sm:$0xf]
    %v120 = vld [vmem:[#allocation5 + $0x28] sm:$0xf]
    %v121 = vld [vmem:[#allocation5 + $0x2c] sm:$0xf]
    %v122 = vld [vmem:[#allocation5 + $0x30] sm:$0xf]
    %v123 = vld [vmem:[#allocation5 + $0x34] sm:$0xf]
    %v124 = vld [vmem:[#allocation5 + $0x38] sm:$0xf]
    %v125 = vld [vmem:[#allocation5 + $0x3c] sm:$0xf]
    %v126 = vld [vmem:[#allocation5 + $0x40] sm:$0xf]
    %v127 = vld [vmem:[#allocation5 + $0x44] sm:$0xf]
    %v128 = vld [vmem:[#allocation5 + $0x48] sm:$0xf]
    %v129 = vld [vmem:[#allocation5 + $0x4c] sm:$0xf]
    %v130 = vld [vmem:[#allocation5 + $0x50] sm:$0xf]
    %v131 = vld [vmem:[#allocation5 + $0x54] sm:$0xf]
    %v132 = vld [vmem:[#allocation5 + $0x58] sm:$0xf]
    %v133 = vld [vmem:[#allocation5 + $0x5c] sm:$0xf]
    %v134 = vld [vmem:[#allocation5 + $0x60] sm:$0xf]
    %v135 = vld [vmem:[#allocation5 + $0x64] sm:$0xf]
    %v136 = vld [vmem:[#allocation5 + $0x68] sm:$0xf]
    %v137 = vld [vmem:[#allocation5 + $0x6c] sm:$0xf]
    %v138 = vld [vmem:[#allocation5 + $0x70] sm:$0xf]
    %v139 = vld [vmem:[#allocation5 + $0x74] sm:$0xf]
    %v140 = vld [vmem:[#allocation5 + $0x78] sm:$0xf]
    %v141 = vld [vmem:[#allocation5 + $0x7c] sm:$0xf]
    %v142 = vld [vmem:[%s2] sm:$0x1]
    %v144 = vperm.slane %v142, 0
    %v147 = vunpack.c.l.b16 %v109
    %v148 = vunpack.c.h.b16 %v109
    %v149 = vpack.c.b16 %v147, %v147
    %v150 = vpack.c.b16 %v148, %v148
    %v185 = vunpack.c.l.b16 %v110
    %v186 = vunpack.c.l.b16 %v111
    %v187 = vunpack.c.l.b16 %v112
    %v188 = vunpack.c.l.b16 %v113
    %v189 = vunpack.c.l.b16 %v114
    %v190 = vunpack.c.l.b16 %v115
    %v191 = vunpack.c.l.b16 %v116
    %v192 = vunpack.c.l.b16 %v117
    %v193 = vunpack.c.l.b16 %v118
    %v194 = vunpack.c.l.b16 %v119
    %v195 = vunpack.c.l.b16 %v120
    %v196 = vunpack.c.l.b16 %v121
    %v197 = vunpack.c.l.b16 %v122
    %v198 = vunpack.c.l.b16 %v123
    %v199 = vunpack.c.l.b16 %v124
    %v200 = vunpack.c.l.b16 %v125
    %v201 = vunpack.c.l.b16 %v126
    %v202 = vunpack.c.l.b16 %v127
    %v203 = vunpack.c.l.b16 %v128
    %v204 = vunpack.c.l.b16 %v129
    %v205 = vunpack.c.l.b16 %v130
    %v206 = vunpack.c.l.b16 %v131
    %v207 = vunpack.c.l.b16 %v132
    %v208 = vunpack.c.l.b16 %v133
    %v209 = vunpack.c.l.b16 %v134
    %v210 = vunpack.c.l.b16 %v135
    %v211 = vunpack.c.l.b16 %v136
    %v212 = vunpack.c.l.b16 %v137
    %v213 = vunpack.c.l.b16 %v138
    %v214 = vunpack.c.l.b16 %v139
    %v215 = vunpack.c.l.b16 %v140
    %v216 = vunpack.c.l.b16 %v141
    %v217 = vpack.c.b16 %v186, %v185
    %v218 = vpack.c.b16 %v188, %v187
    %v219 = vpack.c.b16 %v190, %v189
    %v220 = vpack.c.b16 %v192, %v191
    %v221 = vpack.c.b16 %v194, %v193
    %v222 = vpack.c.b16 %v196, %v195
    %v223 = vpack.c.b16 %v198, %v197
    %v224 = vpack.c.b16 %v200, %v199
    %v225 = vpack.c.b16 %v202, %v201
    %v226 = vpack.c.b16 %v204, %v203
    %v227 = vpack.c.b16 %v206, %v205
    %v228 = vpack.c.b16 %v208, %v207
    %v229 = vpack.c.b16 %v210, %v209
    %v230 = vpack.c.b16 %v212, %v211
    %v231 = vpack.c.b16 %v214, %v213
    %v232 = vpack.c.b16 %v216, %v215
    %249 = vmatpush.bf16.msra.mxu0 %v224
    %250 = vmatpush.bf16.msra.mxu0 %v223
    %251 = vmatpush.bf16.msra.mxu0 %v222
    %252 = vmatpush.bf16.msra.mxu0 %v221
    %253 = vmatpush.bf16.msra.mxu0 %v220
    %254 = vmatpush.bf16.msra.mxu0 %v219
    %255 = vmatpush.bf16.msra.mxu0 %v218
    %256 = vmatpush.bf16.msra.mxu0 %v217
    %257 = vmatmul.bf16.gmra.mxu0 %v149
    %v258 = vpop.f32.mrf.mxu0
    %v259 = vadd.f32 %v144, %v258
    %v260 = vpop.f32.mrf.mxu0
    %261 = vdwg.mxu0
    %262 = vmatpush.bf16.msra.mxu0 %v232
    %263 = vmatpush.bf16.msra.mxu0 %v231
    %264 = vmatpush.bf16.msra.mxu0 %v230
    %265 = vmatpush.bf16.msra.mxu0 %v229
    %266 = vmatpush.bf16.msra.mxu0 %v228
    %267 = vmatpush.bf16.msra.mxu0 %v227
    %268 = vmatpush.bf16.msra.mxu0 %v226
    %269 = vmatpush.bf16.msra.mxu0 %v225
    %270 = vmatmul.bf16.gmra.mxu0 %v150
    %v271 = vpop.f32.mrf.mxu0
    %v272 = vadd.f32 %v259, %v271
    %v273 = vpop.f32.mrf.mxu0
    %274 = vdwg.mxu0
    %v275 = vmax.f32 %v272, 0.0
    %v276 = vpack.c.bf16 %v275, %v275
    %v277 = vld [vmem:[#allocation7] sm:$0xf]
    %v278 = vld [vmem:[#allocation7 + $0x4] sm:$0xf]
    %v279 = vld [vmem:[#allocation7 + $0x8] sm:$0xf]
    %v280 = vld [vmem:[#allocation7 + $0xc] sm:$0xf]
    %v281 = vld [vmem:[#allocation7 + $0x10] sm:$0xf]
    %v282 = vld [vmem:[#allocation7 + $0x14] sm:$0xf]
    %v283 = vld [vmem:[#allocation7 + $0x18] sm:$0xf]
    %v284 = vld [vmem:[#allocation7 + $0x1c] sm:$0xf]
    %v285 = vld [vmem:[#allocation7 + $0x20] sm:$0xf]
    %v286 = vld [vmem:[#allocation7 + $0x24] sm:$0xf]
    %v287 = vld [vmem:[#allocation7 + $0x28] sm:$0xf]
    %v288 = vld [vmem:[#allocation7 + $0x2c] sm:$0xf]
    %v289 = vld [vmem:[#allocation7 + $0x30] sm:$0xf]
    %v290 = vld [vmem:[#allocation7 + $0x34] sm:$0xf]
    %v291 = vld [vmem:[#allocation7 + $0x38] sm:$0xf]
    %v292 = vld [vmem:[#allocation7 + $0x3c] sm:$0xf]
    %v293 = vld [vmem:[%s4] sm:$0x1]
    %v295 = vperm.slane %v293, 0
    %v313 = vunpack.c.l.b16 %v277
    %v314 = vunpack.c.l.b16 %v278
    %v315 = vunpack.c.l.b16 %v279
    %v316 = vunpack.c.l.b16 %v280
    %v317 = vunpack.c.l.b16 %v281
    %v318 = vunpack.c.l.b16 %v282
    %v319 = vunpack.c.l.b16 %v283
    %v320 = vunpack.c.l.b16 %v284
    %v321 = vunpack.c.l.b16 %v285
    %v322 = vunpack.c.l.b16 %v286
    %v323 = vunpack.c.l.b16 %v287
    %v324 = vunpack.c.l.b16 %v288
    %v325 = vunpack.c.l.b16 %v289
    %v326 = vunpack.c.l.b16 %v290
    %v327 = vunpack.c.l.b16 %v291
    %v328 = vunpack.c.l.b16 %v292
    %v329 = vpack.c.b16 %v314, %v313
    %v330 = vpack.c.b16 %v316, %v315
    %v331 = vpack.c.b16 %v318, %v317
    %v332 = vpack.c.b16 %v320, %v319
    %v333 = vpack.c.b16 %v322, %v321
    %v334 = vpack.c.b16 %v324, %v323
    %v335 = vpack.c.b16 %v326, %v325
    %v336 = vpack.c.b16 %v328, %v327
    %345 = vmatpush.bf16.msra.mxu0 %v336
    %346 = vmatpush.bf16.msra.mxu0 %v335
    %347 = vmatpush.bf16.msra.mxu0 %v334
    %348 = vmatpush.bf16.msra.mxu0 %v333
    %349 = vmatpush.bf16.msra.mxu0 %v332
    %350 = vmatpush.bf16.msra.mxu0 %v331
    %351 = vmatpush.bf16.msra.mxu0 %v330
    %352 = vmatpush.bf16.msra.mxu0 %v329
    %353 = vmatmul.bf16.gmra.mxu0 %v276
    %v354 = vpop.f32.mrf.mxu0
    %v355 = vadd.f32 %v295, %v354
    %v356 = vpop.f32.mrf.mxu0
    %357 = vdwg.mxu0
    %v358 = vmax.f32 %v355, 0.0
    %v359 = vpack.c.bf16 %v358, %v358
    %v360 = vld [vmem:[#allocation8] sm:$0xf]
    %v361 = vld [vmem:[#allocation8 + $0x4] sm:$0xf]
    %v362 = vld [vmem:[#allocation8 + $0x8] sm:$0xf]
    %v363 = vld [vmem:[#allocation8 + $0xc] sm:$0xf]
    %v364 = vld [vmem:[#allocation8 + $0x10] sm:$0xf]
    %v365 = vld [vmem:[#allocation8 + $0x14] sm:$0xf]
    %v366 = vld [vmem:[#allocation8 + $0x18] sm:$0xf]
    %v367 = vld [vmem:[#allocation8 + $0x1c] sm:$0xf]
    %v368 = vld [vmem:[#allocation8 + $0x20] sm:$0xf]
    %v369 = vld [vmem:[#allocation8 + $0x24] sm:$0xf]
    %v370 = vld [vmem:[#allocation8 + $0x28] sm:$0xf]
    %v371 = vld [vmem:[#allocation8 + $0x2c] sm:$0xf]
    %v372 = vld [vmem:[#allocation8 + $0x30] sm:$0xf]
    %v373 = vld [vmem:[#allocation8 + $0x34] sm:$0xf]
    %v374 = vld [vmem:[#allocation8 + $0x38] sm:$0xf]
    %v375 = vld [vmem:[#allocation8 + $0x3c] sm:$0xf]
    %v376 = vld [vmem:[%s6] sm:$0x1]
    %v378 = vperm.slane %v376, 0
    %v396 = vunpack.c.l.b16 %v360
    %v397 = vunpack.c.l.b16 %v361
    %v398 = vunpack.c.l.b16 %v362
    %v399 = vunpack.c.l.b16 %v363
    %v400 = vunpack.c.l.b16 %v364
    %v401 = vunpack.c.l.b16 %v365
    %v402 = vunpack.c.l.b16 %v366
    %v403 = vunpack.c.l.b16 %v367
    %v404 = vunpack.c.l.b16 %v368
    %v405 = vunpack.c.l.b16 %v369
    %v406 = vunpack.c.l.b16 %v370
    %v407 = vunpack.c.l.b16 %v371
    %v408 = vunpack.c.l.b16 %v372
    %v409 = vunpack.c.l.b16 %v373
    %v410 = vunpack.c.l.b16 %v374
    %v411 = vunpack.c.l.b16 %v375
    %v412 = vpack.c.b16 %v397, %v396
    %v413 = vpack.c.b16 %v399, %v398
    %v414 = vpack.c.b16 %v401, %v400
    %v415 = vpack.c.b16 %v403, %v402
    %v416 = vpack.c.b16 %v405, %v404
    %v417 = vpack.c.b16 %v407, %v406
    %v418 = vpack.c.b16 %v409, %v408
    %v419 = vpack.c.b16 %v411, %v410
    %428 = vmatpush.bf16.msra.mxu0 %v419
    %429 = vmatpush.bf16.msra.mxu0 %v418
    %430 = vmatpush.bf16.msra.mxu0 %v417
    %431 = vmatpush.bf16.msra.mxu0 %v416
    %432 = vmatpush.bf16.msra.mxu0 %v415
    %433 = vmatpush.bf16.msra.mxu0 %v414
    %434 = vmatpush.bf16.msra.mxu0 %v413
    %435 = vmatpush.bf16.msra.mxu0 %v412
    %436 = vmatmul.bf16.gmra.mxu0 %v359
    %v437 = vpop.f32.mrf.mxu0
    %v438 = vadd.f32 %v378, %v437
    %v439 = vpop.f32.mrf.mxu0
    %440 = vdwg.mxu0
    %v441 = vmax.f32 %v438, 0.0
    %v442 = vpack.c.bf16 %v441, %v441
    %v443 = vld [vmem:[#allocation10] sm:$0xf]
    %v444 = vld [vmem:[#allocation10 + $0x4] sm:$0xf]
    %v445 = vld [vmem:[#allocation10 + $0x8] sm:$0xf]
    %v446 = vld [vmem:[#allocation10 + $0xc] sm:$0xf]
    %v447 = vld [vmem:[#allocation10 + $0x10] sm:$0xf]
    %v448 = vld [vmem:[#allocation10 + $0x14] sm:$0xf]
    %v449 = vld [vmem:[#allocation10 + $0x18] sm:$0xf]
    %v450 = vld [vmem:[#allocation10 + $0x1c] sm:$0xf]
    %v451 = vld [vmem:[#allocation10 + $0x20] sm:$0xf]
    %v452 = vld [vmem:[#allocation10 + $0x24] sm:$0xf]
    %v453 = vld [vmem:[#allocation10 + $0x28] sm:$0xf]
    %v454 = vld [vmem:[#allocation10 + $0x2c] sm:$0xf]
    %v455 = vld [vmem:[#allocation10 + $0x30] sm:$0xf]
    %v456 = vld [vmem:[#allocation10 + $0x34] sm:$0xf]
    %v457 = vld [vmem:[#allocation10 + $0x38] sm:$0xf]
    %v458 = vld [vmem:[#allocation10 + $0x3c] sm:$0xf]
    %v459 = vld [vmem:[%s8] sm:$0x1]
    %v461 = vperm.slane %v459, 0
    %v479 = vunpack.c.l.b16 %v443
    %v480 = vunpack.c.l.b16 %v444
    %v481 = vunpack.c.l.b16 %v445
    %v482 = vunpack.c.l.b16 %v446
    %v483 = vunpack.c.l.b16 %v447
    %v484 = vunpack.c.l.b16 %v448
    %v485 = vunpack.c.l.b16 %v449
    %v486 = vunpack.c.l.b16 %v450
    %v487 = vunpack.c.l.b16 %v451
    %v488 = vunpack.c.l.b16 %v452
    %v489 = vunpack.c.l.b16 %v453
    %v490 = vunpack.c.l.b16 %v454
    %v491 = vunpack.c.l.b16 %v455
    %v492 = vunpack.c.l.b16 %v456
    %v493 = vunpack.c.l.b16 %v457
    %v494 = vunpack.c.l.b16 %v458
    %v495 = vpack.c.b16 %v480, %v479
    %v496 = vpack.c.b16 %v482, %v481
    %v497 = vpack.c.b16 %v484, %v483
    %v498 = vpack.c.b16 %v486, %v485
    %v499 = vpack.c.b16 %v488, %v487
    %v500 = vpack.c.b16 %v490, %v489
    %v501 = vpack.c.b16 %v492, %v491
    %v502 = vpack.c.b16 %v494, %v493
    %511 = vmatpush.bf16.msra.mxu0 %v502
    %512 = vmatpush.bf16.msra.mxu0 %v501
    %513 = vmatpush.bf16.msra.mxu0 %v500
    %514 = vmatpush.bf16.msra.mxu0 %v499
    %515 = vmatpush.bf16.msra.mxu0 %v498
    %516 = vmatpush.bf16.msra.mxu0 %v497
    %517 = vmatpush.bf16.msra.mxu0 %v496
    %518 = vmatpush.bf16.msra.mxu0 %v495
    %519 = vmatmul.bf16.gmra.mxu0 %v442
    %v520 = vpop.f32.mrf.mxu0
    %v521 = vadd.f32 %v461, %v520
    %v522 = vpop.f32.mrf.mxu0
    %523 = vdwg.mxu0
    %524 = vmax.xlane.f32.xlu0 %v521
    %v525 = vpop.xlane.xlu0 %524
    %v526 = vsub.f32 %v521, %v525
    %v527 = vmul.f32 %v526, 1.442695
    %v528 = vpow.pop %v527
    %529 = vadd.xlane.f32.xlu0 %v528
    %v530 = vpop.xlane.xlu0 %529
    %v531 = vrcp.pop %v530
    %v532 = vmul.f32 %v530, %v531
    %v533 = vsub.f32 1.0, %v532
    %v534 = vmul.f32 %v531, %v533
    %v535 = vadd.f32 %v531, %v534
    %vm536 = vweird.f32 %v530
    %vm537 = vweird.f32 %v531
    %vm538 = vmor %vm536, %vm537
    %v539 = vsel %vm538, %v531, %v535
    %v540 = vand.u32 2147483647, %v530
    %vm541 = vcmp.eq.f32.partialorder %v540, 8.507059e+37
    %v542 = vand.u32 %v530, 2147483648
    %v543 = vor.u32 1.1754944e-38, %v542
    %v544 = vsel %vm541, %v543, %v539
    %v545 = vmul.f32 %v528, %v544
    %546 = vst [vmem:[#allocation11] sm:$0xff] %v545
    // Predicated region
    $region58: #{tpu_custom_call.1} parent=1 // pred_check
      _
    $region59: #{tpu_custom_call.1} parent=1 // pred_check_branch
      %548 = sbr.rel (0) target = $region61
    $region60: #{tpu_custom_call.1} parent=1 // pred_region
      %550 = vsyncadd [#allocation4], 0
      %s552 = sshll.u32 [#allocation11], 4
      %s553 = int_to_ptr.vmem [resolvable:$true] %s552
      %s554 = sshll.u32 %s9, 4
      %s555 = int_to_ptr.hbm [resolvable:$true] %s554
      %557 = dma.vmem_to_hbm [thread:$0]  %s553, 128, %s555, [#allocation4]
    $region61: #{tpu_custom_call.1} parent=1 // pred_fallthru
      _
    // Predicated region
    $region62: #{tpu_custom_call.1} parent=1 // pred_check
      _
    $region63: #{tpu_custom_call.1} parent=1 // pred_check_branch
      %559 = sbr.rel (0) target = $region65
    $region64: #{tpu_custom_call.1} parent=1 // pred_region
      %561 = dma.done [#allocation4], 128
    $region65: #{tpu_custom_call.1} parent=1 // pred_fallthru
      _
    %562 = vsyncpa [#allocation3], 1
    %563 = vsyncpa [#allocation6], 1
    %564 = vsyncpa [#allocation9], 1
    %565 = vsyncpa [#allocation4], 1

</llo_original>
